<compile_context>
chip_gen: v5e
topology: v5e:2x2
jax: 0.10.0
libtpu: 0.0.40
codegen_flags: <defaults>
</compile_context>

<pallas_src>
import math

import numpy as np
import jax
import jax.numpy as jnp
from jax import lax
from jax.experimental import pallas as pl
from jax.experimental.pallas import tpu as pltpu  # noqa: F401  (not needed at toy size)

# ----------------------------- config (small) --------------------------------
B = 2            # batch
T = 8            # target sequence length
S = 8            # source (memory) sequence length (== T so constants are shared)
D = 32           # d_model
H = 4            # num_attention_heads
DH = D // H      # attention head size
DFF = 64         # d_ff
EPS = 1e-6
NEG = -1e20

BT = B * T       # rows of the activation slab
BHK = B * H * T  # rows of the segmented (batch*head*key) score axis


# --------------------------------- kernel -------------------------------------
def decoder_layer_kernel(
    x_ref, mem_ref, amasks_ref, gmat_ref, blk3_ref,
    sqkv_w_ref, cqkv_w_ref, w1_ref, w2_ref, vec_ref,
    out_ref,
):
    x = x_ref[...]            # (BT, D)
    mem = mem_ref[...]        # (BT, D)   (S == T)
    amasks = amasks_ref[...]  # (2*BT, BHK)  [self ; cross] additive masks
    gmat = gmat_ref[...]      # (BHK, BT)    (b,h,t)-row -> (b,t)-row selector
    blk3 = blk3_ref[...]      # (BHK, 3D)    [blk*scale | blk | segexp]
    vecs = vec_ref[...]       # (5, 128)     packed small vectors

    # --- unpack the small-vector slab (static slices) ---
    sqkv_b = vecs[0:1, :]                  # (1, 4D) = [sq_b|sk_b|sv_b|1]
    cq_b = vecs[1:2, :D]                   # (1, D)
    ckv_b = vecs[1:2, D:]                  # (1, 3D) = [ck_b|cv_b|1]
    b1 = vecs[2:3, :DFF]                   # (1, DFF)
    b2 = vecs[2:3, DFF:DFF + D]            # (1, D)
    ln1_a = vecs[3:4, :D];       ln1_b = vecs[3:4, D:2 * D]
    ln2_a = vecs[3:4, 2 * D:3 * D]; ln2_b = vecs[3:4, 3 * D:]
    ln3_a = vecs[4:5, :D];       ln3_b = vecs[4:5, D:2 * D]

    amask_self = amasks[:BT]
    amask_cross = amasks[BT:]

    def attend(q, kv_aug, amask):
        # q: (BT, D); kv_aug: (BT, 3D) = [K | V | 1]; amask: (BT, BHK).
        # One gmat matmul builds scaled block-diag K, block-diag V, and the
        # per-segment denominator picker in a single (BHK, 3D) slab.
        aug = jnp.dot(gmat, kv_aug, preferred_element_type=jnp.float32) * blk3
        kb = aug[:, :D]        # (BHK, D)  scaled, head-block-diagonal K
        vseg = aug[:, D:]      # (BHK, 2D) = [Vblk | segexp]
        # All-heads / all-batches scores in one matmul (scale pre-folded).
        s = lax.dot_general(q, kb, (((1,), (1,)), ((), ())),
                            preferred_element_type=jnp.float32) + amask
        m = jnp.max(s, axis=-1, keepdims=True)
        e = jnp.exp(s - m)     # masked / cross-batch entries -> 0
        # Fused PV + per-segment denominator in one matmul.
        tmp = jnp.dot(e, vseg, preferred_element_type=jnp.float32)  # (BT, 2D)
        den = jnp.maximum(tmp[:, D:], 1e-30)
        return tmp[:, :D] * pl.reciprocal(den, approx=True)         # (BT, D)

    def layernorm(xx, a, b):
        # Unbiased std, eps added to std (matches the PyTorch module).
        s1 = jnp.sum(xx, axis=-1, keepdims=True)           # independent
        s2 = jnp.sum(xx * xx, axis=-1, keepdims=True)      # reductions
        mean = s1 * (1.0 / D)
        var = (s2 - s1 * mean) * (1.0 / (D - 1))
        inv = pl.reciprocal(jnp.sqrt(var) + EPS, approx=True)
        return a * ((xx - mean) * inv) + b

    # x = norm1(x + self_attn(x, x, x, tgt_mask))          (dropout = identity)
    qkv = (jnp.dot(x, sqkv_w_ref[...], preferred_element_type=jnp.float32)
           + sqkv_b)                                       # (BT, 4D) = [Q|K|V|1]
    sa = attend(qkv[:, :D], qkv[:, D:], amask_self)
    x = layernorm(x + sa, ln1_a, ln1_b)

    # x = norm2(x + src_attn(x, memory, memory, src_mask))
    cqkv_w = cqkv_w_ref[...]                               # (D, 4D) = [Wq|Wk|Wv|0]
    q = jnp.dot(x, cqkv_w[:, :D], preferred_element_type=jnp.float32) + cq_b
    kv = jnp.dot(mem, cqkv_w[:, D:], preferred_element_type=jnp.float32) + ckv_b
    ca = attend(q, kv, amask_cross)
    x = layernorm(x + ca, ln2_a, ln2_b)

    # x = norm3(x + feed_forward(x))
    h = jnp.maximum(
        jnp.dot(x, w1_ref[...], preferred_element_type=jnp.float32) + b1, 0.0)
    ff = jnp.dot(h, w2_ref[...], preferred_element_type=jnp.float32) + b2
    x = layernorm(x + ff, ln3_a, ln3_b)

    out_ref[...] = x.astype(out_ref.dtype)


# -------------------- one-time constant / parameter preparation ----------------
def _segment_constants():
    """Shared constants for self- and cross-attention (requires T == S)."""
    assert T == S
    rows = BHK
    r = np.arange(rows)
    b_idx = r // (H * T)
    h_idx = (r // T) % H
    t_idx = r % T
    # gmat @ kv replicates each batch's K/V block H times.
    gmat = np.zeros((rows, B * T), np.float32)
    gmat[r, b_idx * T + t_idx] = 1.0
    # blkmask keeps only the lanes of that row's head; it doubles as segexp
    # (the per-segment softmax-denominator picker).
    head_of_lane = np.arange(D) // DH
    blkmask = (h_idx[:, None] == head_of_lane[None, :]).astype(np.float32)  # (rows, D)
    scale = 1.0 / math.sqrt(DH)
    blk3 = np.concatenate([blkmask * scale, blkmask, blkmask], axis=1)       # (rows, 3D)
    return jnp.asarray(gmat), jnp.asarray(blk3)


def _additive_mask(mask, Tq, Tk):
    """(B, Tq, Tk) float mask (0 => masked) -> (B*Tq, B*H*Tk) additive mask."""
    add = jnp.where(mask == 0.0, NEG, 0.0).astype(jnp.float32)           # (B,Tq,Tk)
    add = jnp.tile(add[:, :, None, :], (1, 1, H, 1)).reshape(B, Tq, H * Tk)
    eye = jnp.arange(B)[:, None] == jnp.arange(B)[None, :]               # (B,B)
    big = jnp.where(eye[:, None, :, None], add[:, :, None, :], NEG)      # (B,Tq,B,H*Tk)
    return big.reshape(B * Tq, B * H * Tk).astype(jnp.float32)


def prepare_masks(src_mask, tgt_mask):
    """Call once per mask pattern (off the per-call path for static masks)."""
    amask_s = _additive_mask(tgt_mask, T, T)     # (BT, BHK)
    amask_c = _additive_mask(src_mask, T, S)     # (BT, BHK)
    return jnp.concatenate([amask_s, amask_c], axis=0)   # (2*BT, BHK)


def prepare_params(params):
    """Call once: fuse/augment weights, pack small vectors, build constants."""
    zeros_dd = jnp.zeros((D, D), jnp.float32)
    ones_row = jnp.ones((1, D), jnp.float32)
    # Augmented projections: extra D columns of zeros (weight) / ones (bias)
    # make the projection emit [... | 1], which the gmat matmul turns into the
    # per-segment denominator picker (segexp) for free.
    sqkv_w = jnp.concatenate(
        [params["sq_w"], params["sk_w"], params["sv_w"], zeros_dd], axis=1)  # (D,4D)
    cqkv_w = jnp.concatenate(
        [params["cq_w"], params["ck_w"], params["cv_w"], zeros_dd], axis=1)  # (D,4D)
    row0 = jnp.concatenate(
        [params["sq_b"], params["sk_b"], params["sv_b"], ones_row], axis=1)  # (1,128)
    row1 = jnp.concatenate(
        [params["cq_b"], params["ck_b"], params["cv_b"], ones_row], axis=1)  # (1,128)
    row2 = jnp.concatenate(
        [params["b1"], params["b2"], jnp.zeros((1, 128 - DFF - D), jnp.float32)],
        axis=1)                                                              # (1,128)
    row3 = jnp.concatenate(
        [params["ln1_a"], params["ln1_b"], params["ln2_a"], params["ln2_b"]],
        axis=1)                                                              # (1,128)
    row4 = jnp.concatenate(
        [params["ln3_a"], params["ln3_b"], jnp.zeros((1, 128 - 2 * D), jnp.float32)],
        axis=1)                                                              # (1,128)
    vecs = jnp.concatenate([row0, row1, row2, row3, row4], axis=0)           # (5,128)
    gmat, blk3 = _segment_constants()
    return {
        "sqkv_w": sqkv_w, "cqkv_w": cqkv_w,
        "w1": params["w1"], "w2": params["w2"],
        "vecs": vecs, "gmat": gmat, "blk3": blk3,
    }


# --------------------------------- wrapper ------------------------------------
@jax.jit
def decoder_layer(x, memory, amasks, prepared):
    """x: (B,T,D), memory: (B,S,D), amasks: prepare_masks(...), prepared: prepare_params(...)."""
    x2d = x.reshape(BT, D)
    mem2d = memory.reshape(B * S, D)
    out = pl.pallas_call(
        decoder_layer_kernel,
        out_shape=jax.ShapeDtypeStruct((BT, D), jnp.float32),
    )(x2d, mem2d, amasks,
      prepared["gmat"], prepared["blk3"],
      prepared["sqkv_w"], prepared["cqkv_w"],
      prepared["w1"], prepared["w2"], prepared["vecs"])
    return out.reshape(B, T, D)


# ------------------------------ reference (JAX) --------------------------------
def _ref_layernorm(x, a, b):
    mean = jnp.mean(x, axis=-1, keepdims=True)
    var = jnp.sum((x - mean) ** 2, axis=-1, keepdims=True) / (x.shape[-1] - 1)
    return a * (x - mean) / (jnp.sqrt(var) + EPS) + b


def _ref_mha(q_in, kv_in, mask, wq, bq, wk, bk, wv, bv):
    q = q_in @ wq + bq
    k = kv_in @ wk + bk
    v = kv_in @ wv + bv
    Bq, Tq, _ = q.shape
    Tk = k.shape[1]
    q = q.reshape(Bq, Tq, H, DH).transpose(0, 2, 1, 3)
    k = k.reshape(Bq, Tk, H, DH).transpose(0, 2, 1, 3)
    v = v.reshape(Bq, Tk, H, DH).transpose(0, 2, 1, 3)
    scores = jnp.einsum("bhqd,bhkd->bhqk", q, k) / math.sqrt(DH)
    scores = jnp.where(mask[:, None] == 0.0, NEG, scores)
    p = jax.nn.softmax(scores, axis=-1)
    o = jnp.einsum("bhqk,bhkd->bhqd", p, v)
    return o.transpose(0, 2, 1, 3).reshape(Bq, Tq, D)


def decoder_layer_ref(x, memory, src_mask, tgt_mask, p):
    sa = _ref_mha(x, x, tgt_mask, p["sq_w"], p["sq_b"], p["sk_w"], p["sk_b"],
                  p["sv_w"], p["sv_b"])
    x = _ref_layernorm(x + sa, p["ln1_a"], p["ln1_b"])
    ca = _ref_mha(x, memory, src_mask, p["cq_w"], p["cq_b"], p["ck_w"],
                  p["ck_b"], p["cv_w"], p["cv_b"])
    x = _ref_layernorm(x + ca, p["ln2_a"], p["ln2_b"])
    ff = jnp.maximum(x @ p["w1"] + p["b1"], 0.0) @ p["w2"] + p["b2"]
    return _ref_layernorm(x + ff, p["ln3_a"], p["ln3_b"])


# ----------------------------------- main --------------------------------------
if __name__ == "__main__":
    keys = jax.random.split(jax.random.PRNGKey(0), 18)

    def init_w(k, shape, scale=0.1):
        return (scale * jax.random.normal(k, shape)).astype(jnp.float32)

    params = {
        # self-attention q/k/v
        "sq_w": init_w(keys[0], (D, D)), "sq_b": init_w(keys[1], (1, D)),
        "sk_w": init_w(keys[2], (D, D)), "sk_b": init_w(keys[3], (1, D)),
        "sv_w": init_w(keys[4], (D, D)), "sv_b": init_w(keys[5], (1, D)),
        # src-attention q/k/v
        "cq_w": init_w(keys[6], (D, D)), "cq_b": init_w(keys[7], (1, D)),
        "ck_w": init_w(keys[8], (D, D)), "ck_b": init_w(keys[9], (1, D)),
        "cv_w": init_w(keys[10], (D, D)), "cv_b": init_w(keys[11], (1, D)),
        # feed-forward
        "w1": init_w(keys[12], (D, DFF)), "b1": init_w(keys[13], (1, DFF)),
        "w2": init_w(keys[14], (DFF, D)), "b2": init_w(keys[15], (1, D)),
        # layernorm affine params (ones / zeros like nn.Parameter init)
        "ln1_a": jnp.ones((1, D), jnp.float32), "ln1_b": jnp.zeros((1, D), jnp.float32),
        "ln2_a": jnp.ones((1, D), jnp.float32), "ln2_b": jnp.zeros((1, D), jnp.float32),
        "ln3_a": jnp.ones((1, D), jnp.float32), "ln3_b": jnp.zeros((1, D), jnp.float32),
    }

    x = jax.random.normal(keys[16], (B, T, D), jnp.float32)
    memory = jax.random.normal(keys[17], (B, S, D), jnp.float32)

    # Causal target mask, all-ones source mask (float: 0 => masked).
    tgt_mask = jnp.tril(jnp.ones((T, T), jnp.float32))[None].repeat(B, axis=0)
    src_mask = jnp.ones((B, T, S), jnp.float32)

    # One-time preprocessing (off the per-call path).
    prepared = jax.tree_util.tree_map(jax.block_until_ready, prepare_params(params))
    amasks = jax.block_until_ready(prepare_masks(src_mask, tgt_mask))

    out = jax.block_until_ready(decoder_layer(x, memory, amasks, prepared))
    ref = decoder_layer_ref(x, memory, src_mask, tgt_mask, params)

    assert out.shape == (B, T, D)
    # Tolerance accounts for the EUP approximate reciprocals (softmax
    # normalisation + LayerNorm); genuine bugs would be O(1) off.
    assert jnp.allclose(out, ref, atol=1e-2, rtol=1e-2), "mismatch vs JAX reference"
    print("KERNEL_OK")
</pallas_src>

<mosaic_0001>
module attributes {stable_mosaic.version = 11 : i64} {
  func.func @decoder_layer_kernel(%arg0: memref<16x32xf32, #tpu.memory_space<vmem>>, %arg1: memref<16x32xf32, #tpu.memory_space<vmem>>, %arg2: memref<32x64xf32, #tpu.memory_space<vmem>>, %arg3: memref<64x16xf32, #tpu.memory_space<vmem>>, %arg4: memref<64x96xf32, #tpu.memory_space<vmem>>, %arg5: memref<32x128xf32, #tpu.memory_space<vmem>>, %arg6: memref<32x128xf32, #tpu.memory_space<vmem>>, %arg7: memref<32x64xf32, #tpu.memory_space<vmem>>, %arg8: memref<64x32xf32, #tpu.memory_space<vmem>>, %arg9: memref<5x128xf32, #tpu.memory_space<vmem>>, %arg10: memref<16x32xf32, #tpu.memory_space<vmem>>) attributes {dimension_semantics = [], scalar_prefetch = 0 : i64, scratch_operands = 0 : i64, tpu.core_type = #tpu.core_type<tc>} {
    %c0 = arith.constant 0 : index
    %c0_0 = arith.constant 0 : index
    %0 = vector.load %arg0[%c0, %c0_0] : memref<16x32xf32, #tpu.memory_space<vmem>>, vector<16x32xf32>
    %c0_1 = arith.constant 0 : index
    %c0_2 = arith.constant 0 : index
    %1 = vector.load %arg1[%c0_1, %c0_2] : memref<16x32xf32, #tpu.memory_space<vmem>>, vector<16x32xf32>
    %c0_3 = arith.constant 0 : index
    %c0_4 = arith.constant 0 : index
    %2 = vector.load %arg2[%c0_3, %c0_4] : memref<32x64xf32, #tpu.memory_space<vmem>>, vector<32x64xf32>
    %c0_5 = arith.constant 0 : index
    %c0_6 = arith.constant 0 : index
    %3 = vector.load %arg3[%c0_5, %c0_6] : memref<64x16xf32, #tpu.memory_space<vmem>>, vector<64x16xf32>
    %c0_7 = arith.constant 0 : index
    %c0_8 = arith.constant 0 : index
    %4 = vector.load %arg4[%c0_7, %c0_8] : memref<64x96xf32, #tpu.memory_space<vmem>>, vector<64x96xf32>
    %c0_9 = arith.constant 0 : index
    %c0_10 = arith.constant 0 : index
    %5 = vector.load %arg9[%c0_9, %c0_10] : memref<5x128xf32, #tpu.memory_space<vmem>>, vector<5x128xf32>
    %6 = vector.extract_strided_slice %5 {offsets = [0, 0], sizes = [1, 128], strides = [1, 1]} : vector<5x128xf32> to vector<1x128xf32>
    %7 = vector.extract_strided_slice %5 {offsets = [1, 0], sizes = [1, 32], strides = [1, 1]} : vector<5x128xf32> to vector<1x32xf32>
    %8 = vector.extract_strided_slice %5 {offsets = [1, 32], sizes = [1, 96], strides = [1, 1]} : vector<5x128xf32> to vector<1x96xf32>
    %9 = vector.extract_strided_slice %5 {offsets = [2, 0], sizes = [1, 64], strides = [1, 1]} : vector<5x128xf32> to vector<1x64xf32>
    %10 = vector.extract_strided_slice %5 {offsets = [2, 64], sizes = [1, 32], strides = [1, 1]} : vector<5x128xf32> to vector<1x32xf32>
    %11 = vector.extract_strided_slice %5 {offsets = [3, 0], sizes = [1, 32], strides = [1, 1]} : vector<5x128xf32> to vector<1x32xf32>
    %12 = vector.extract_strided_slice %5 {offsets = [3, 32], sizes = [1, 32], strides = [1, 1]} : vector<5x128xf32> to vector<1x32xf32>
    %13 = vector.extract_strided_slice %5 {offsets = [3, 64], sizes = [1, 32], strides = [1, 1]} : vector<5x128xf32> to vector<1x32xf32>
    %14 = vector.extract_strided_slice %5 {offsets = [3, 96], sizes = [1, 32], strides = [1, 1]} : vector<5x128xf32> to vector<1x32xf32>
    %15 = vector.extract_strided_slice %5 {offsets = [4, 0], sizes = [1, 32], strides = [1, 1]} : vector<5x128xf32> to vector<1x32xf32>
    %16 = vector.extract_strided_slice %5 {offsets = [4, 32], sizes = [1, 32], strides = [1, 1]} : vector<5x128xf32> to vector<1x32xf32>
    %17 = vector.extract_strided_slice %2 {offsets = [0, 0], sizes = [16, 64], strides = [1, 1]} : vector<32x64xf32> to vector<16x64xf32>
    %18 = vector.extract_strided_slice %2 {offsets = [16, 0], sizes = [16, 64], strides = [1, 1]} : vector<32x64xf32> to vector<16x64xf32>
    %c0_11 = arith.constant 0 : index
    %c0_12 = arith.constant 0 : index
    %19 = vector.load %arg5[%c0_11, %c0_12] : memref<32x128xf32, #tpu.memory_space<vmem>>, vector<32x128xf32>
    %cst = arith.constant dense<0.000000e+00> : vector<16x128xf32>
    %20 = tpu.matmul %0, %19, %cst {dimension_numbers = #tpu.dot_dimension_numbers<[1], [0], [0], [1], [0, 0, 1, 1], [], []>} : vector<16x32xf32>, vector<32x128xf32>, vector<16x128xf32> -> vector<16x128xf32>
    %21 = vector.broadcast %6 : vector<1x128xf32> to vector<16x128xf32>
    %22 = arith.addf %20, %21 : vector<16x128xf32>
    %23 = vector.extract_strided_slice %22 {offsets = [0, 0], sizes = [16, 32], strides = [1, 1]} : vector<16x128xf32> to vector<16x32xf32>
    %24 = vector.extract_strided_slice %22 {offsets = [0, 32], sizes = [16, 96], strides = [1, 1]} : vector<16x128xf32> to vector<16x96xf32>
    %cst_13 = arith.constant dense<0.000000e+00> : vector<64x96xf32>
    %25 = tpu.matmul %3, %24, %cst_13 {dimension_numbers = #tpu.dot_dimension_numbers<[1], [0], [0], [1], [0, 0, 1, 1], [], []>} : vector<64x16xf32>, vector<16x96xf32>, vector<64x96xf32> -> vector<64x96xf32>
    %26 = arith.mulf %25, %4 : vector<64x96xf32>
    %27 = vector.extract_strided_slice %26 {offsets = [0, 0], sizes = [64, 32], strides = [1, 1]} : vector<64x96xf32> to vector<64x32xf32>
    %28 = vector.extract_strided_slice %26 {offsets = [0, 32], sizes = [64, 64], strides = [1, 1]} : vector<64x96xf32> to vector<64x64xf32>
    %cst_14 = arith.constant dense<0.000000e+00> : vector<16x64xf32>
    %29 = tpu.matmul %23, %27, %cst_14 {dimension_numbers = #tpu.dot_dimension_numbers<[1], [1], [0], [0], [0, 0, 1, 0], [], []>} : vector<16x32xf32>, vector<64x32xf32>, vector<16x64xf32> -> vector<16x64xf32>
    %30 = arith.addf %29, %17 : vector<16x64xf32>
    %cst_15 = arith.constant dense<0xFF800000> : vector<16xf32>
    %31 = vector.multi_reduction <maximumf>, %30, %cst_15 [1] : vector<16x64xf32> to vector<16xf32>
    %32 = vector.shape_cast %31 : vector<16xf32> to vector<16x1xf32>
    %33 = vector.broadcast %32 : vector<16x1xf32> to vector<16x64xf32>
    %34 = arith.subf %30, %33 : vector<16x64xf32>
    %35 = math.exp %34 : vector<16x64xf32>
    %cst_16 = arith.constant dense<0.000000e+00> : vector<16x64xf32>
    %36 = tpu.matmul %35, %28, %cst_16 {dimension_numbers = #tpu.dot_dimension_numbers<[1], [0], [0], [1], [0, 0, 1, 1], [], []>} : vector<16x64xf32>, vector<64x64xf32>, vector<16x64xf32> -> vector<16x64xf32>
    %37 = vector.extract_strided_slice %36 {offsets = [0, 32], sizes = [16, 32], strides = [1, 1]} : vector<16x64xf32> to vector<16x32xf32>
    %cst_17 = arith.constant 1.000000e-30 : f32
    %38 = vector.broadcast %cst_17 : f32 to vector<16x32xf32>
    %39 = arith.maximumf %37, %38 : vector<16x32xf32>
    %40 = vector.extract_strided_slice %36 {offsets = [0, 0], sizes = [16, 32], strides = [1, 1]} : vector<16x64xf32> to vector<16x32xf32>
    %41 = tpu.reciprocal %39 {approx = true} : vector<16x32xf32> -> vector<16x32xf32>
    %42 = arith.mulf %40, %41 : vector<16x32xf32>
    %43 = arith.addf %0, %42 : vector<16x32xf32>
    %cst_18 = arith.constant dense<0.000000e+00> : vector<16xf32>
    %44 = vector.multi_reduction <add>, %43, %cst_18 [1] : vector<16x32xf32> to vector<16xf32>
    %45 = vector.shape_cast %44 : vector<16xf32> to vector<16x1xf32>
    %46 = arith.mulf %43, %43 : vector<16x32xf32>
    %cst_19 = arith.constant dense<0.000000e+00> : vector<16xf32>
    %47 = vector.multi_reduction <add>, %46, %cst_19 [1] : vector<16x32xf32> to vector<16xf32>
    %48 = vector.shape_cast %47 : vector<16xf32> to vector<16x1xf32>
    %cst_20 = arith.constant 3.125000e-02 : f32
    %49 = vector.broadcast %cst_20 : f32 to vector<16x1xf32>
    %50 = arith.mulf %45, %49 : vector<16x1xf32>
    %51 = arith.mulf %45, %50 : vector<16x1xf32>
    %52 = arith.subf %48, %51 : vector<16x1xf32>
    %cst_21 = arith.constant 0.0322580636 : f32
    %53 = vector.broadcast %cst_21 : f32 to vector<16x1xf32>
    %54 = arith.mulf %52, %53 : vector<16x1xf32>
    %55 = math.sqrt %54 : vector<16x1xf32>
    %cst_22 = arith.constant 9.99999997E-7 : f32
    %56 = vector.broadcast %cst_22 : f32 to vector<16x1xf32>
    %57 = arith.addf %55, %56 : vector<16x1xf32>
    %58 = tpu.reciprocal %57 {approx = true} : vector<16x1xf32> -> vector<16x1xf32>
    %59 = vector.broadcast %50 : vector<16x1xf32> to vector<16x32xf32>
    %60 = arith.subf %43, %59 : vector<16x32xf32>
    %61 = vector.broadcast %58 : vector<16x1xf32> to vector<16x32xf32>
    %62 = arith.mulf %60, %61 : vector<16x32xf32>
    %63 = vector.broadcast %11 : vector<1x32xf32> to vector<16x32xf32>
    %64 = arith.mulf %63, %62 : vector<16x32xf32>
    %65 = vector.broadcast %12 : vector<1x32xf32> to vector<16x32xf32>
    %66 = arith.addf %64, %65 : vector<16x32xf32>
    %c0_23 = arith.constant 0 : index
    %c0_24 = arith.constant 0 : index
    %67 = vector.load %arg6[%c0_23, %c0_24] : memref<32x128xf32, #tpu.memory_space<vmem>>, vector<32x128xf32>
    %68 = vector.extract_strided_slice %67 {offsets = [0, 0], sizes = [32, 32], strides = [1, 1]} : vector<32x128xf32> to vector<32x32xf32>
    %cst_25 = arith.constant dense<0.000000e+00> : vector<16x32xf32>
    %69 = tpu.matmul %66, %68, %cst_25 {dimension_numbers = #tpu.dot_dimension_numbers<[1], [0], [0], [1], [0, 0, 1, 1], [], []>} : vector<16x32xf32>, vector<32x32xf32>, vector<16x32xf32> -> vector<16x32xf32>
    %70 = vector.broadcast %7 : vector<1x32xf32> to vector<16x32xf32>
    %71 = arith.addf %69, %70 : vector<16x32xf32>
    %72 = vector.extract_strided_slice %67 {offsets = [0, 32], sizes = [32, 96], strides = [1, 1]} : vector<32x128xf32> to vector<32x96xf32>
    %cst_26 = arith.constant dense<0.000000e+00> : vector<16x96xf32>
    %73 = tpu.matmul %1, %72, %cst_26 {dimension_numbers = #tpu.dot_dimension_numbers<[1], [0], [0], [1], [0, 0, 1, 1], [], []>} : vector<16x32xf32>, vector<32x96xf32>, vector<16x96xf32> -> vector<16x96xf32>
    %74 = vector.broadcast %8 : vector<1x96xf32> to vector<16x96xf32>
    %75 = arith.addf %73, %74 : vector<16x96xf32>
    %cst_27 = arith.constant dense<0.000000e+00> : vector<64x96xf32>
    %76 = tpu.matmul %3, %75, %cst_27 {dimension_numbers = #tpu.dot_dimension_numbers<[1], [0], [0], [1], [0, 0, 1, 1], [], []>} : vector<64x16xf32>, vector<16x96xf32>, vector<64x96xf32> -> vector<64x96xf32>
    %77 = arith.mulf %76, %4 : vector<64x96xf32>
    %78 = vector.extract_strided_slice %77 {offsets = [0, 0], sizes = [64, 32], strides = [1, 1]} : vector<64x96xf32> to vector<64x32xf32>
    %79 = vector.extract_strided_slice %77 {offsets = [0, 32], sizes = [64, 64], strides = [1, 1]} : vector<64x96xf32> to vector<64x64xf32>
    %cst_28 = arith.constant dense<0.000000e+00> : vector<16x64xf32>
    %80 = tpu.matmul %71, %78, %cst_28 {dimension_numbers = #tpu.dot_dimension_numbers<[1], [1], [0], [0], [0, 0, 1, 0], [], []>} : vector<16x32xf32>, vector<64x32xf32>, vector<16x64xf32> -> vector<16x64xf32>
    %81 = arith.addf %80, %18 : vector<16x64xf32>
    %cst_29 = arith.constant dense<0xFF800000> : vector<16xf32>
    %82 = vector.multi_reduction <maximumf>, %81, %cst_29 [1] : vector<16x64xf32> to vector<16xf32>
    %83 = vector.shape_cast %82 : vector<16xf32> to vector<16x1xf32>
    %84 = vector.broadcast %83 : vector<16x1xf32> to vector<16x64xf32>
    %85 = arith.subf %81, %84 : vector<16x64xf32>
    %86 = math.exp %85 : vector<16x64xf32>
    %cst_30 = arith.constant dense<0.000000e+00> : vector<16x64xf32>
    %87 = tpu.matmul %86, %79, %cst_30 {dimension_numbers = #tpu.dot_dimension_numbers<[1], [0], [0], [1], [0, 0, 1, 1], [], []>} : vector<16x64xf32>, vector<64x64xf32>, vector<16x64xf32> -> vector<16x64xf32>
    %88 = vector.extract_strided_slice %87 {offsets = [0, 32], sizes = [16, 32], strides = [1, 1]} : vector<16x64xf32> to vector<16x32xf32>
    %cst_31 = arith.constant 1.000000e-30 : f32
    %89 = vector.broadcast %cst_31 : f32 to vector<16x32xf32>
    %90 = arith.maximumf %88, %89 : vector<16x32xf32>
    %91 = vector.extract_strided_slice %87 {offsets = [0, 0], sizes = [16, 32], strides = [1, 1]} : vector<16x64xf32> to vector<16x32xf32>
    %92 = tpu.reciprocal %90 {approx = true} : vector<16x32xf32> -> vector<16x32xf32>
    %93 = arith.mulf %91, %92 : vector<16x32xf32>
    %94 = arith.addf %66, %93 : vector<16x32xf32>
    %cst_32 = arith.constant dense<0.000000e+00> : vector<16xf32>
    %95 = vector.multi_reduction <add>, %94, %cst_32 [1] : vector<16x32xf32> to vector<16xf32>
    %96 = vector.shape_cast %95 : vector<16xf32> to vector<16x1xf32>
    %97 = arith.mulf %94, %94 : vector<16x32xf32>
    %cst_33 = arith.constant dense<0.000000e+00> : vector<16xf32>
    %98 = vector.multi_reduction <add>, %97, %cst_33 [1] : vector<16x32xf32> to vector<16xf32>
    %99 = vector.shape_cast %98 : vector<16xf32> to vector<16x1xf32>
    %cst_34 = arith.constant 3.125000e-02 : f32
    %100 = vector.broadcast %cst_34 : f32 to vector<16x1xf32>
    %101 = arith.mulf %96, %100 : vector<16x1xf32>
    %102 = arith.mulf %96, %101 : vector<16x1xf32>
    %103 = arith.subf %99, %102 : vector<16x1xf32>
    %cst_35 = arith.constant 0.0322580636 : f32
    %104 = vector.broadcast %cst_35 : f32 to vector<16x1xf32>
    %105 = arith.mulf %103, %104 : vector<16x1xf32>
    %106 = math.sqrt %105 : vector<16x1xf32>
    %cst_36 = arith.constant 9.99999997E-7 : f32
    %107 = vector.broadcast %cst_36 : f32 to vector<16x1xf32>
    %108 = arith.addf %106, %107 : vector<16x1xf32>
    %109 = tpu.reciprocal %108 {approx = true} : vector<16x1xf32> -> vector<16x1xf32>
    %110 = vector.broadcast %101 : vector<16x1xf32> to vector<16x32xf32>
    %111 = arith.subf %94, %110 : vector<16x32xf32>
    %112 = vector.broadcast %109 : vector<16x1xf32> to vector<16x32xf32>
    %113 = arith.mulf %111, %112 : vector<16x32xf32>
    %114 = vector.broadcast %13 : vector<1x32xf32> to vector<16x32xf32>
    %115 = arith.mulf %114, %113 : vector<16x32xf32>
    %116 = vector.broadcast %14 : vector<1x32xf32> to vector<16x32xf32>
    %117 = arith.addf %115, %116 : vector<16x32xf32>
    %c0_37 = arith.constant 0 : index
    %c0_38 = arith.constant 0 : index
    %118 = vector.load %arg7[%c0_37, %c0_38] : memref<32x64xf32, #tpu.memory_space<vmem>>, vector<32x64xf32>
    %cst_39 = arith.constant dense<0.000000e+00> : vector<16x64xf32>
    %119 = tpu.matmul %117, %118, %cst_39 {dimension_numbers = #tpu.dot_dimension_numbers<[1], [0], [0], [1], [0, 0, 1, 1], [], []>} : vector<16x32xf32>, vector<32x64xf32>, vector<16x64xf32> -> vector<16x64xf32>
    %120 = vector.broadcast %9 : vector<1x64xf32> to vector<16x64xf32>
    %121 = arith.addf %119, %120 : vector<16x64xf32>
    %cst_40 = arith.constant 0.000000e+00 : f32
    %122 = vector.broadcast %cst_40 : f32 to vector<16x64xf32>
    %123 = arith.maximumf %121, %122 : vector<16x64xf32>
    %c0_41 = arith.constant 0 : index
    %c0_42 = arith.constant 0 : index
    %124 = vector.load %arg8[%c0_41, %c0_42] : memref<64x32xf32, #tpu.memory_space<vmem>>, vector<64x32xf32>
    %cst_43 = arith.constant dense<0.000000e+00> : vector<16x32xf32>
    %125 = tpu.matmul %123, %124, %cst_43 {dimension_numbers = #tpu.dot_dimension_numbers<[1], [0], [0], [1], [0, 0, 1, 1], [], []>} : vector<16x64xf32>, vector<64x32xf32>, vector<16x32xf32> -> vector<16x32xf32>
    %126 = vector.broadcast %10 : vector<1x32xf32> to vector<16x32xf32>
    %127 = arith.addf %125, %126 : vector<16x32xf32>
    %128 = arith.addf %117, %127 : vector<16x32xf32>
    %cst_44 = arith.constant dense<0.000000e+00> : vector<16xf32>
    %129 = vector.multi_reduction <add>, %128, %cst_44 [1] : vector<16x32xf32> to vector<16xf32>
    %130 = vector.shape_cast %129 : vector<16xf32> to vector<16x1xf32>
    %131 = arith.mulf %128, %128 : vector<16x32xf32>
    %cst_45 = arith.constant dense<0.000000e+00> : vector<16xf32>
    %132 = vector.multi_reduction <add>, %131, %cst_45 [1] : vector<16x32xf32> to vector<16xf32>
    %133 = vector.shape_cast %132 : vector<16xf32> to vector<16x1xf32>
    %cst_46 = arith.constant 3.125000e-02 : f32
    %134 = vector.broadcast %cst_46 : f32 to vector<16x1xf32>
    %135 = arith.mulf %130, %134 : vector<16x1xf32>
    %136 = arith.mulf %130, %135 : vector<16x1xf32>
    %137 = arith.subf %133, %136 : vector<16x1xf32>
    %cst_47 = arith.constant 0.0322580636 : f32
    %138 = vector.broadcast %cst_47 : f32 to vector<16x1xf32>
    %139 = arith.mulf %137, %138 : vector<16x1xf32>
    %140 = math.sqrt %139 : vector<16x1xf32>
    %cst_48 = arith.constant 9.99999997E-7 : f32
    %141 = vector.broadcast %cst_48 : f32 to vector<16x1xf32>
    %142 = arith.addf %140, %141 : vector<16x1xf32>
    %143 = tpu.reciprocal %142 {approx = true} : vector<16x1xf32> -> vector<16x1xf32>
    %144 = vector.broadcast %135 : vector<16x1xf32> to vector<16x32xf32>
    %145 = arith.subf %128, %144 : vector<16x32xf32>
    %146 = vector.broadcast %143 : vector<16x1xf32> to vector<16x32xf32>
    %147 = arith.mulf %145, %146 : vector<16x32xf32>
    %148 = vector.broadcast %15 : vector<1x32xf32> to vector<16x32xf32>
    %149 = arith.mulf %148, %147 : vector<16x32xf32>
    %150 = vector.broadcast %16 : vector<1x32xf32> to vector<16x32xf32>
    %151 = arith.addf %149, %150 : vector<16x32xf32>
    %c0_49 = arith.constant 0 : index
    %c0_50 = arith.constant 0 : index
    %152 = vector.load %arg10[%c0_49, %c0_50] : memref<16x32xf32, #tpu.memory_space<vmem>>, vector<16x32xf32>
    tpu.vector_store %arg10[%c0_49, %c0_50], %151 {strides = array<i32>} : memref<16x32xf32, #tpu.memory_space<vmem>>, vector<16x32xf32>,
    return
  }
}

</mosaic_0001>

<llo_original>
// kernel: decoder_layer.1
$region0: #{decoder_layer.1}
  #allocation0 [shape = 'u32[]', space=smem, size = 0x4, offset = 0x4, fixed_abs, tag = 'smem constant byte address 0x4 - core index']
  #allocation1 [shape = 'u32[72,128]{1,0:T(1,128)}', space=vmem, size = 0x9000, scoped, tag = 'internal scratch']
  %s0 = inlined_call_operand.vmem [shape: f32[16,32], index: 0, kind: input, shape index: {}]
  %s1 = inlined_call_operand.hbm [shape: f32[16,32], index: 1, kind: input, shape index: {}]
  %s2 = inlined_call_operand.vmem [shape: f32[32,64], index: 2, kind: input, shape index: {}]
  %s3 = inlined_call_operand.vmem [shape: f32[64,16], index: 3, kind: input, shape index: {}]
  %s4 = inlined_call_operand.vmem [shape: f32[64,96], index: 4, kind: input, shape index: {}]
  %s5 = inlined_call_operand.vmem [shape: f32[32,128], index: 5, kind: input, shape index: {}]
  %s6 = inlined_call_operand.hbm [shape: f32[32,128], index: 6, kind: input, shape index: {}]
  %s7 = inlined_call_operand.hbm [shape: f32[32,64], index: 7, kind: input, shape index: {}]
  %s8 = inlined_call_operand.vmem [shape: f32[64,32], index: 8, kind: input, shape index: {}]
  %s9 = inlined_call_operand.hbm [shape: f32[5,128], index: 9, kind: input, shape index: {}]
  %s10 = inlined_call_operand.hbm [shape: f32[16,32], index: 10, kind: output, shape index: {}]
  %s11 = sld [smem:[#allocation0]]
  $region66: #{decoder_layer.1} parent=0
    _
  %s13 = ssub.s32 1, %s11
  %s14 = scalar_select 0, %s13, %s11
  $region1: #{decoder_layer.1} parent=0
    #allocation2 [shape = 'u8[8192]{0}', space=vmem, size = 0x2000, scoped, tag = 'input window, operand 1, single buffered']
    #allocation3 [shape = 's32[1]{0}', space=sflag, size = 0x4, scoped, tag = 'scoped memory for decoder_layer.1']
    #allocation4 [shape = 's32[1]{0}', space=sflag, size = 0x4, scoped, tag = 'scoped memory for decoder_layer.1']
    #allocation5 [shape = 'u8[16384]{0}', space=vmem, size = 0x4000, scoped, tag = 'input window, operand 6, single buffered']
    #allocation6 [shape = 's32[1]{0}', space=sflag, size = 0x4, scoped, tag = 'scoped memory for decoder_layer.1']
    #allocation7 [shape = 'u8[16384]{0}', space=vmem, size = 0x4000, scoped, tag = 'input window, operand 7, single buffered']
    #allocation8 [shape = 'u8[4096]{0}', space=vmem, size = 0x1000, scoped, tag = 'input window, operand 9, single buffered']
    #allocation9 [shape = 's32[1]{0}', space=sflag, size = 0x4, scoped, tag = 'scoped memory for decoder_layer.1']
    #allocation10 [shape = 'u8[8192]{0}', space=vmem, size = 0x2000, scoped, tag = 'output window, operand 0, single buffered']
    %15 = vsyncpa [#allocation3], 0
    %16 = vsyncpa [#allocation6], 0
    %17 = vsyncpa [#allocation9], 0
    %18 = vsyncpa [#allocation4], 0
    // Predicated region
    $region2: #{decoder_layer.1} parent=1 // pred_check
      _
    $region3: #{decoder_layer.1} parent=1 // pred_check_branch
      %20 = sbr.rel (0) target = $region5
    $region4: #{decoder_layer.1} parent=1 // pred_region
      _
    $region5: #{decoder_layer.1} parent=1 // pred_fallthru
      _
    // Predicated region
    $region6: #{decoder_layer.1} parent=1 // pred_check
      _
    $region7: #{decoder_layer.1} parent=1 // pred_check_branch
      %22 = sbr.rel (0) target = $region9
    $region8: #{decoder_layer.1} parent=1 // pred_region
      %24 = vsyncadd [#allocation3], 0
      %s25 = sshll.u32 %s1, 4
      %s26 = int_to_ptr.hbm [resolvable:$true] %s25
      %s27 = sshll.u32 [#allocation2], 4
      %s28 = int_to_ptr.vmem [resolvable:$true] %s27
      %33 = dma.hbm_to_vmem [thread:$0]  %s26, 256, %s28, [#allocation3], 128, 128, 8
    $region9: #{decoder_layer.1} parent=1 // pred_fallthru
      _
    // Predicated region
    $region10: #{decoder_layer.1} parent=1 // pred_check
      _
    $region11: #{decoder_layer.1} parent=1 // pred_check_branch
      %35 = sbr.rel (0) target = $region13
    $region12: #{decoder_layer.1} parent=1 // pred_region
      _
    $region13: #{decoder_layer.1} parent=1 // pred_fallthru
      _
    // Predicated region
    $region14: #{decoder_layer.1} parent=1 // pred_check
      _
    $region15: #{decoder_layer.1} parent=1 // pred_check_branch
      %37 = sbr.rel (0) target = $region17
    $region16: #{decoder_layer.1} parent=1 // pred_region
      _
    $region17: #{decoder_layer.1} parent=1 // pred_fallthru
      _
    // Predicated region
    $region18: #{decoder_layer.1} parent=1 // pred_check
      _
    $region19: #{decoder_layer.1} parent=1 // pred_check_branch
      %39 = sbr.rel (0) target = $region21
    $region20: #{decoder_layer.1} parent=1 // pred_region
      _
    $region21: #{decoder_layer.1} parent=1 // pred_fallthru
      _
    // Predicated region
    $region22: #{decoder_layer.1} parent=1 // pred_check
      _
    $region23: #{decoder_layer.1} parent=1 // pred_check_branch
      %41 = sbr.rel (0) target = $region25
    $region24: #{decoder_layer.1} parent=1 // pred_region
      _
    $region25: #{decoder_layer.1} parent=1 // pred_fallthru
      _
    // Predicated region
    $region26: #{decoder_layer.1} parent=1 // pred_check
      _
    $region27: #{decoder_layer.1} parent=1 // pred_check_branch
      %43 = sbr.rel (0) target = $region29
    $region28: #{decoder_layer.1} parent=1 // pred_region
      %45 = vsyncadd [#allocation6], 0
      %s46 = sshll.u32 %s6, 4
      %s47 = int_to_ptr.hbm [resolvable:$true] %s46
      %s48 = sshll.u32 [#allocation5], 4
      %s49 = int_to_ptr.vmem [resolvable:$true] %s48
      %54 = dma.hbm_to_vmem [thread:$0]  %s47, 512, %s49, [#allocation6], 128, 128, 8
    $region29: #{decoder_layer.1} parent=1 // pred_fallthru
      _
    // Predicated region
    $region30: #{decoder_layer.1} parent=1 // pred_check
      _
    $region31: #{decoder_layer.1} parent=1 // pred_check_branch
      %56 = sbr.rel (0) target = $region33
    $region32: #{decoder_layer.1} parent=1 // pred_region
      %58 = vsyncadd [#allocation6], 0
      %s59 = sshll.u32 %s7, 4
      %s60 = int_to_ptr.hbm [resolvable:$true] %s59
      %s61 = sshll.u32 [#allocation7], 4
      %s62 = int_to_ptr.vmem [resolvable:$true] %s61
      %67 = dma.hbm_to_vmem [thread:$0]  %s60, 512, %s62, [#allocation6], 128, 128, 8
    $region33: #{decoder_layer.1} parent=1 // pred_fallthru
      _
    // Predicated region
    $region34: #{decoder_layer.1} parent=1 // pred_check
      _
    $region35: #{decoder_layer.1} parent=1 // pred_check_branch
      %69 = sbr.rel (0) target = $region37
    $region36: #{decoder_layer.1} parent=1 // pred_region
      _
    $region37: #{decoder_layer.1} parent=1 // pred_fallthru
      _
    // Predicated region
    $region38: #{decoder_layer.1} parent=1 // pred_check
      _
    $region39: #{decoder_layer.1} parent=1 // pred_check_branch
      %71 = sbr.rel (0) target = $region41
    $region40: #{decoder_layer.1} parent=1 // pred_region
      %73 = vsyncadd [#allocation9], 0
      %s75 = sshll.u32 %s9, 4
      %s76 = int_to_ptr.hbm [resolvable:$true] %s75
      %s77 = sshll.u32 [#allocation8], 4
      %s78 = int_to_ptr.vmem [resolvable:$true] %s77
      %80 = dma.hbm_to_vmem [thread:$0]  %s76, 128, %s78, [#allocation9]
    $region41: #{decoder_layer.1} parent=1 // pred_fallthru
      _
    // Predicated region
    $region42: #{decoder_layer.1} parent=1 // pred_check
      _
    $region43: #{decoder_layer.1} parent=1 // pred_check_branch
      %82 = sbr.rel (0) target = $region45
    $region44: #{decoder_layer.1} parent=1 // pred_region
      %84 = dma.done [#allocation3], 256
    $region45: #{decoder_layer.1} parent=1 // pred_fallthru
      _
    // Predicated region
    $region46: #{decoder_layer.1} parent=1 // pred_check
      _
    $region47: #{decoder_layer.1} parent=1 // pred_check_branch
      %86 = sbr.rel (0) target = $region49
    $region48: #{decoder_layer.1} parent=1 // pred_region
      %88 = dma.done [#allocation6], 512
    $region49: #{decoder_layer.1} parent=1 // pred_fallthru
      _
    // Predicated region
    $region50: #{decoder_layer.1} parent=1 // pred_check
      _
    $region51: #{decoder_layer.1} parent=1 // pred_check_branch
      %90 = sbr.rel (0) target = $region53
    $region52: #{decoder_layer.1} parent=1 // pred_region
      %92 = dma.done [#allocation6], 512
    $region53: #{decoder_layer.1} parent=1 // pred_fallthru
      _
    // Predicated region
    $region54: #{decoder_layer.1} parent=1 // pred_check
      _
    $region55: #{decoder_layer.1} parent=1 // pred_check_branch
      %94 = sbr.rel (0) target = $region57
    $region56: #{decoder_layer.1} parent=1 // pred_region
      %96 = dma.done [#allocation9], 128
    $region57: #{decoder_layer.1} parent=1 // pred_fallthru
      _
    %v97 = vld [vmem:[%s0] sm:$0xff]
    %v98 = vld [vmem:[%s0 + $0x8] sm:$0xff]
    %v99 = vld [vmem:[#allocation2] sm:$0xff]
    %v100 = vld [vmem:[#allocation2 + $0x8] sm:$0xff]
    %v101 = vld [vmem:[%s2] sm:$0xff]
    %v102 = vld [vmem:[%s2 + $0x8] sm:$0xff]
    %v103 = vld [vmem:[%s2 + $0x10] sm:$0xff]
    %v104 = vld [vmem:[%s2 + $0x18] sm:$0xff]
    %v105 = vld [vmem:[%s3] sm:$0xff]
    %v106 = vld [vmem:[%s3 + $0x8] sm:$0xff]
    %v107 = vld [vmem:[%s3 + $0x10] sm:$0xff]
    %v108 = vld [vmem:[%s3 + $0x18] sm:$0xff]
    %v109 = vld [vmem:[%s3 + $0x20] sm:$0xff]
    %v110 = vld [vmem:[%s3 + $0x28] sm:$0xff]
    %v111 = vld [vmem:[%s3 + $0x30] sm:$0xff]
    %v112 = vld [vmem:[%s3 + $0x38] sm:$0xff]
    %v113 = vld [vmem:[%s4] sm:$0xff]
    %v114 = vld [vmem:[%s4 + $0x8] sm:$0xff]
    %v115 = vld [vmem:[%s4 + $0x10] sm:$0xff]
    %v116 = vld [vmem:[%s4 + $0x18] sm:$0xff]
    %v117 = vld [vmem:[%s4 + $0x20] sm:$0xff]
    %v118 = vld [vmem:[%s4 + $0x28] sm:$0xff]
    %v119 = vld [vmem:[%s4 + $0x30] sm:$0xff]
    %v120 = vld [vmem:[%s4 + $0x38] sm:$0xff]
    %v121 = vld [vmem:[#allocation8] sm:$0x1f]
    %v122 = vld [vmem:[%s5] sm:$0xff]
    %v123 = vld [vmem:[%s5 + $0x8] sm:$0xff]
    %v124 = vld [vmem:[%s5 + $0x10] sm:$0xff]
    %v125 = vld [vmem:[%s5 + $0x18] sm:$0xff]
    %v126 = vperm.slane %v121, 0
    %vm127 = vcmask 261120
    %v129 = vsel %vm127, %v97, 0
    %v132 = vsel %vm127, %v98, 0
    %134 = vmatpush.msra.mxu0 0.0
    %135 = vmatpush.msra.mxu0 0.0
    %136 = vmatpush.msra.mxu0 0.0
    %137 = vmatpush.msra.mxu0 0.0
    %138 = vmatpush.msra.mxu0 0.0
    %139 = vmatpush.msra.mxu0 0.0
    %140 = vmatpush.msra.mxu0 0.0
    %141 = vmatpush.msra.mxu0 0.0
    %142 = vmatpush.msra.mxu0 0.0
    %143 = vmatpush.msra.mxu0 0.0
    %144 = vmatpush.msra.mxu0 0.0
    %145 = vmatpush.msra.mxu0 0.0
    %146 = vmatpush.msra.mxu0 %v125
    %147 = vmatpush.msra.mxu0 %v124
    %148 = vmatpush.msra.mxu0 %v123
    %149 = vmatpush.msra.mxu0 %v122
    %150 = vmatmul.f32.gmra.mxu0 %v129
    %v151 = vpop.f32.mrf.mxu0
    %v152 = vadd.f32 %v126, %v151
    %153 = vmatmul.f32.gmra.mxu0 %v132
    %v154 = vpop.f32.mrf.mxu0
    %v155 = vadd.f32 %v126, %v154
    %156 = vdwg.mxu0
    %159 = vrot.lane.b32.xlu0 %v152, 96
    %v160 = vpop.permute.xlu0 %159
    %161 = vrot.lane.b32.xlu0 %v155, 96
    %v162 = vpop.permute.xlu0 %161
    %vm165 = vcmask 130048
    %v167 = vsel %vm165, %v105, 0
    %v170 = vsel %vm165, %v106, 0
    %v173 = vsel %vm165, %v107, 0
    %v176 = vsel %vm165, %v108, 0
    %v179 = vsel %vm165, %v109, 0
    %v182 = vsel %vm165, %v110, 0
    %v185 = vsel %vm165, %v111, 0
    %v188 = vsel %vm165, %v112, 0
    %190 = vmatpush.msra.mxu0 0.0
    %191 = vmatpush.msra.mxu0 0.0
    %192 = vmatpush.msra.mxu0 0.0
    %193 = vmatpush.msra.mxu0 0.0
    %194 = vmatpush.msra.mxu0 0.0
    %195 = vmatpush.msra.mxu0 0.0
    %196 = vmatpush.msra.mxu0 0.0
    %197 = vmatpush.msra.mxu0 0.0
    %198 = vmatpush.msra.mxu0 0.0
    %199 = vmatpush.msra.mxu0 0.0
    %200 = vmatpush.msra.mxu0 0.0
    %201 = vmatpush.msra.mxu0 0.0
    %202 = vmatpush.msra.mxu0 0.0
    %203 = vmatpush.msra.mxu0 0.0
    %204 = vmatpush.msra.mxu0 %v162
    %205 = vmatpush.msra.mxu0 %v160
    %206 = vmatmul.f32.gmra.mxu0 %v167
    %v207 = vpop.f32.mrf.mxu0
    %v208 = vadd.f32 0.0, %v207
    %209 = vmatmul.f32.gmra.mxu0 %v170
    %v210 = vpop.f32.mrf.mxu0
    %v211 = vadd.f32 0.0, %v210
    %212 = vmatmul.f32.gmra.mxu0 %v173
    %v213 = vpop.f32.mrf.mxu0
    %v214 = vadd.f32 0.0, %v213
    %215 = vmatmul.f32.gmra.mxu0 %v176
    %v216 = vpop.f32.mrf.mxu0
    %v217 = vadd.f32 0.0, %v216
    %218 = vmatmul.f32.gmra.mxu0 %v179
    %v219 = vpop.f32.mrf.mxu0
    %v220 = vadd.f32 0.0, %v219
    %221 = vmatmul.f32.gmra.mxu0 %v182
    %v222 = vpop.f32.mrf.mxu0
    %v223 = vadd.f32 0.0, %v222
    %224 = vmatmul.f32.gmra.mxu0 %v185
    %v225 = vpop.f32.mrf.mxu0
    %v226 = vadd.f32 0.0, %v225
    %227 = vmatmul.f32.gmra.mxu0 %v188
    %v228 = vpop.f32.mrf.mxu0
    %v229 = vadd.f32 0.0, %v228
    %230 = vdwg.mxu0
    %v231 = vmul.f32 %v208, %v113
    %v232 = vmul.f32 %v211, %v114
    %v233 = vmul.f32 %v214, %v115
    %v234 = vmul.f32 %v217, %v116
    %v235 = vmul.f32 %v220, %v117
    %v236 = vmul.f32 %v223, %v118
    %v237 = vmul.f32 %v226, %v119
    %v238 = vmul.f32 %v229, %v120
    %v239 = vsel %vm127, %v152, 0
    %v241 = vsel %vm127, %v155, 0
    %v244 = vsel %vm127, %v231, 0
    %v247 = vsel %vm127, %v232, 0
    %v250 = vsel %vm127, %v233, 0
    %v253 = vsel %vm127, %v234, 0
    %v256 = vsel %vm127, %v235, 0
    %v259 = vsel %vm127, %v236, 0
    %v262 = vsel %vm127, %v237, 0
    %v265 = vsel %vm127, %v238, 0
    %267 = vmatpush.xpose.msra.mxu0 0.0
    %268 = vmatpush.xpose.msra.mxu0 0.0
    %269 = vmatpush.xpose.msra.mxu0 0.0
    %270 = vmatpush.xpose.msra.mxu0 0.0
    %271 = vmatpush.xpose.msra.mxu0 0.0
    %272 = vmatpush.xpose.msra.mxu0 0.0
    %273 = vmatpush.xpose.msra.mxu0 0.0
    %274 = vmatpush.xpose.msra.mxu0 0.0
    %275 = vmatpush.xpose.msra.mxu0 %v265
    %276 = vmatpush.xpose.msra.mxu0 %v262
    %277 = vmatpush.xpose.msra.mxu0 %v259
    %278 = vmatpush.xpose.msra.mxu0 %v256
    %279 = vmatpush.xpose.msra.mxu0 %v253
    %280 = vmatpush.xpose.msra.mxu0 %v250
    %281 = vmatpush.xpose.msra.mxu0 %v247
    %282 = vmatpush.xpose.msra.mxu0 %v244
    %283 = vmatmul.f32.gmra.mxu0 %v239
    %v284 = vpop.f32.mrf.mxu0
    %v285 = vadd.f32 %v101, %v284
    %286 = vmatmul.f32.gmra.mxu0 %v241
    %v287 = vpop.f32.mrf.mxu0
    %v288 = vadd.f32 %v102, %v287
    %289 = vdwg.mxu0
    %vm290 = vcmask 523264
    %v291 = vsel %vm290, %v285, -inf
    %292 = vmax.xlane.f32.xlu0 %v291
    %v293 = vpop.xlane.xlu0 %292
    %v294 = vsel %vm290, %v288, -inf
    %295 = vmax.xlane.f32.xlu0 %v294
    %v296 = vpop.xlane.xlu0 %295
    %v297 = vsub.f32 %v285, %v293
    %v298 = vsub.f32 %v288, %v296
    %v299 = vmul.f32 %v297, 1.442695
    %v300 = vpow.pop %v299
    %v301 = vmul.f32 %v298, 1.442695
    %v302 = vpow.pop %v301
    %303 = vrot.lane.b32.xlu0 %v231, 96
    %v304 = vpop.permute.xlu0 %303
    %305 = vrot.lane.b32.xlu0 %v232, 96
    %v306 = vpop.permute.xlu0 %305
    %307 = vrot.lane.b32.xlu0 %v233, 96
    %v308 = vpop.permute.xlu0 %307
    %309 = vrot.lane.b32.xlu0 %v234, 96
    %v310 = vpop.permute.xlu0 %309
    %311 = vrot.lane.b32.xlu0 %v235, 96
    %v312 = vpop.permute.xlu0 %311
    %313 = vrot.lane.b32.xlu0 %v236, 96
    %v314 = vpop.permute.xlu0 %313
    %315 = vrot.lane.b32.xlu0 %v237, 96
    %v316 = vpop.permute.xlu0 %315
    %317 = vrot.lane.b32.xlu0 %v238, 96
    %v318 = vpop.permute.xlu0 %317
    %v328 = vsel %vm290, %v300, 0
    %v331 = vsel %vm290, %v302, 0
    %333 = vmatpush.msra.mxu0 0.0
    %334 = vmatpush.msra.mxu0 0.0
    %335 = vmatpush.msra.mxu0 0.0
    %336 = vmatpush.msra.mxu0 0.0
    %337 = vmatpush.msra.mxu0 0.0
    %338 = vmatpush.msra.mxu0 0.0
    %339 = vmatpush.msra.mxu0 0.0
    %340 = vmatpush.msra.mxu0 0.0
    %341 = vmatpush.msra.mxu0 %v318
    %342 = vmatpush.msra.mxu0 %v316
    %343 = vmatpush.msra.mxu0 %v314
    %344 = vmatpush.msra.mxu0 %v312
    %345 = vmatpush.msra.mxu0 %v310
    %346 = vmatpush.msra.mxu0 %v308
    %347 = vmatpush.msra.mxu0 %v306
    %348 = vmatpush.msra.mxu0 %v304
    %349 = vmatmul.f32.gmra.mxu0 %v328
    %v350 = vpop.f32.mrf.mxu0
    %v351 = vadd.f32 0.0, %v350
    %352 = vmatmul.f32.gmra.mxu0 %v331
    %v353 = vpop.f32.mrf.mxu0
    %v354 = vadd.f32 0.0, %v353
    %355 = vdwg.mxu0
    %v356 = vmax.f32 %v351, 1e-30
    %v357 = vmax.f32 %v354, 1e-30
    %v358 = vrcp.pop %v356
    %v359 = vrcp.pop %v357
    %362 = vrot.lane.b32.xlu0 %v358, 96
    %v363 = vpop.permute.xlu0 %362
    %364 = vrot.lane.b32.xlu0 %v359, 96
    %v365 = vpop.permute.xlu0 %364
    %v368 = vmul.f32 %v351, %v363
    %v369 = vmul.f32 %v354, %v365
    %v370 = vadd.f32 %v97, %v368
    %v371 = vadd.f32 %v98, %v369
    %v372 = vsel %vm127, %v370, 0.0
    %373 = vadd.xlane.f32.xlu0 %v372
    %v374 = vpop.xlane.xlu0 %373
    %v375 = vsel %vm127, %v371, 0.0
    %376 = vadd.xlane.f32.xlu0 %v375
    %v377 = vpop.xlane.xlu0 %376
    %v378 = vmul.f32 %v370, %v370
    %v379 = vmul.f32 %v371, %v371
    %v380 = vsel %vm127, %v378, 0.0
    %381 = vadd.xlane.f32.xlu0 %v380
    %v382 = vpop.xlane.xlu0 %381
    %v383 = vsel %vm127, %v379, 0.0
    %384 = vadd.xlane.f32.xlu0 %v383
    %v385 = vpop.xlane.xlu0 %384
    %v386 = vmul.f32 %v374, 0.03125
    %v387 = vmul.f32 %v377, 0.03125
    %v388 = vmul.f32 %v374, %v386
    %v389 = vmul.f32 %v377, %v387
    %v390 = vsub.f32 %v382, %v388
    %v391 = vsub.f32 %v385, %v389
    %v392 = vmul.f32 %v390, 0.032258064
    %v393 = vmul.f32 %v391, 0.032258064
    %v394 = vrsqrt.pop %v392
    %v395 = vmul.f32 %v394, %v392
    %v396 = vmul.f32 %v395, %v394
    %v397 = vmul.f32 0.5, %v396
    %v398 = vsub.f32 1.5, %v397
    %v399 = vmul.f32 %v394, %v398
    %v400 = vmul.f32 %v392, %v399
    %vm401 = vcmp.eq.f32.partialorder %v392, inf
    %v402 = vsel %vm401, %v392, %v400
    %vm403 = vcmp.eq.f32.partialorder %v392, 0.0
    %v404 = vand.u32 %v392, 2147483648
    %v405 = vsel %vm403, %v404, %v402
    %v406 = vrsqrt.pop %v393
    %v407 = vmul.f32 %v406, %v393
    %v408 = vmul.f32 %v407, %v406
    %v409 = vmul.f32 0.5, %v408
    %v410 = vsub.f32 1.5, %v409
    %v411 = vmul.f32 %v406, %v410
    %v412 = vmul.f32 %v393, %v411
    %vm413 = vcmp.eq.f32.partialorder %v393, inf
    %v414 = vsel %vm413, %v393, %v412
    %vm415 = vcmp.eq.f32.partialorder %v393, 0.0
    %v416 = vand.u32 %v393, 2147483648
    %v417 = vsel %vm415, %v416, %v414
    %v418 = vadd.f32 %v405, 1e-06
    %v419 = vadd.f32 %v417, 1e-06
    %v420 = vrcp.pop %v418
    %v421 = vrcp.pop %v419
    %v422 = vsub.f32 %v370, %v386
    %v423 = vsub.f32 %v371, %v387
    %v424 = vmul.f32 %v422, %v420
    %v425 = vmul.f32 %v423, %v421
    %v426 = vperm.slane %v121, 3
    %v427 = vmul.f32 %v426, %v424
    %v428 = vmul.f32 %v426, %v425
    %430 = vrot.lane.b32.xlu0 %v426, 96
    %v431 = vpop.permute.xlu0 %430
    %v433 = vadd.f32 %v427, %v431
    %v434 = vadd.f32 %v428, %v431
    %v435 = vld [vmem:[#allocation5] sm:$0xff]
    %v436 = vld [vmem:[#allocation5 + $0x8] sm:$0xff]
    %v437 = vld [vmem:[#allocation5 + $0x10] sm:$0xff]
    %v438 = vld [vmem:[#allocation5 + $0x18] sm:$0xff]
    %v439 = vperm.slane %v121, 1
    %v441 = vsel %vm127, %v433, 0
    %v444 = vsel %vm127, %v434, 0
    %446 = vmatpush.msra.mxu0 0.0
    %447 = vmatpush.msra.mxu0 0.0
    %448 = vmatpush.msra.mxu0 0.0
    %449 = vmatpush.msra.mxu0 0.0
    %450 = vmatpush.msra.mxu0 0.0
    %451 = vmatpush.msra.mxu0 0.0
    %452 = vmatpush.msra.mxu0 0.0
    %453 = vmatpush.msra.mxu0 0.0
    %454 = vmatpush.msra.mxu0 0.0
    %455 = vmatpush.msra.mxu0 0.0
    %456 = vmatpush.msra.mxu0 0.0
    %457 = vmatpush.msra.mxu0 0.0
    %458 = vmatpush.msra.mxu0 %v438
    %459 = vmatpush.msra.mxu0 %v437
    %460 = vmatpush.msra.mxu0 %v436
    %461 = vmatpush.msra.mxu0 %v435
    %462 = vmatmul.f32.gmra.mxu0 %v441
    %v463 = vpop.f32.mrf.mxu0
    %v464 = vadd.f32 %v439, %v463
    %465 = vmatmul.f32.gmra.mxu0 %v444
    %v466 = vpop.f32.mrf.mxu0
    %v467 = vadd.f32 %v439, %v466
    %468 = vdwg.mxu0
    %473 = vrot.lane.b32.xlu0 %v435, 96
    %v474 = vpop.permute.xlu0 %473
    %475 = vrot.lane.b32.xlu0 %v436, 96
    %v476 = vpop.permute.xlu0 %475
    %477 = vrot.lane.b32.xlu0 %v437, 96
    %v478 = vpop.permute.xlu0 %477
    %479 = vrot.lane.b32.xlu0 %v438, 96
    %v480 = vpop.permute.xlu0 %479
    %486 = vrot.lane.b32.xlu0 %v439, 96
    %v487 = vpop.permute.xlu0 %486
    %v490 = vsel %vm127, %v99, 0
    %v493 = vsel %vm127, %v100, 0
    %495 = vmatpush.msra.mxu0 0.0
    %496 = vmatpush.msra.mxu0 0.0
    %497 = vmatpush.msra.mxu0 0.0
    %498 = vmatpush.msra.mxu0 0.0
    %499 = vmatpush.msra.mxu0 0.0
    %500 = vmatpush.msra.mxu0 0.0
    %501 = vmatpush.msra.mxu0 0.0
    %502 = vmatpush.msra.mxu0 0.0
    %503 = vmatpush.msra.mxu0 0.0
    %504 = vmatpush.msra.mxu0 0.0
    %505 = vmatpush.msra.mxu0 0.0
    %506 = vmatpush.msra.mxu0 0.0
    %507 = vmatpush.msra.mxu0 %v480
    %508 = vmatpush.msra.mxu0 %v478
    %509 = vmatpush.msra.mxu0 %v476
    %510 = vmatpush.msra.mxu0 %v474
    %511 = vmatmul.f32.gmra.mxu0 %v490
    %v512 = vpop.f32.mrf.mxu0
    %v513 = vadd.f32 %v487, %v512
    %514 = vmatmul.f32.gmra.mxu0 %v493
    %v515 = vpop.f32.mrf.mxu0
    %v516 = vadd.f32 %v487, %v515
    %517 = vdwg.mxu0
    %518 = vmatpush.msra.mxu0 0.0
    %519 = vmatpush.msra.mxu0 0.0
    %520 = vmatpush.msra.mxu0 0.0
    %521 = vmatpush.msra.mxu0 0.0
    %522 = vmatpush.msra.mxu0 0.0
    %523 = vmatpush.msra.mxu0 0.0
    %524 = vmatpush.msra.mxu0 0.0
    %525 = vmatpush.msra.mxu0 0.0
    %526 = vmatpush.msra.mxu0 0.0
    %527 = vmatpush.msra.mxu0 0.0
    %528 = vmatpush.msra.mxu0 0.0
    %529 = vmatpush.msra.mxu0 0.0
    %530 = vmatpush.msra.mxu0 0.0
    %531 = vmatpush.msra.mxu0 0.0
    %532 = vmatpush.msra.mxu0 %v516
    %533 = vmatpush.msra.mxu0 %v513
    %534 = vmatmul.f32.gmra.mxu0 %v167
    %v535 = vpop.f32.mrf.mxu0
    %v536 = vadd.f32 0.0, %v535
    %537 = vmatmul.f32.gmra.mxu0 %v170
    %v538 = vpop.f32.mrf.mxu0
    %v539 = vadd.f32 0.0, %v538
    %540 = vmatmul.f32.gmra.mxu0 %v173
    %v541 = vpop.f32.mrf.mxu0
    %v542 = vadd.f32 0.0, %v541
    %543 = vmatmul.f32.gmra.mxu0 %v176
    %v544 = vpop.f32.mrf.mxu0
    %v545 = vadd.f32 0.0, %v544
    %546 = vmatmul.f32.gmra.mxu0 %v179
    %v547 = vpop.f32.mrf.mxu0
    %v548 = vadd.f32 0.0, %v547
    %549 = vmatmul.f32.gmra.mxu0 %v182
    %v550 = vpop.f32.mrf.mxu0
    %v551 = vadd.f32 0.0, %v550
    %552 = vmatmul.f32.gmra.mxu0 %v185
    %v553 = vpop.f32.mrf.mxu0
    %v554 = vadd.f32 0.0, %v553
    %555 = vmatmul.f32.gmra.mxu0 %v188
    %v556 = vpop.f32.mrf.mxu0
    %v557 = vadd.f32 0.0, %v556
    %558 = vdwg.mxu0
    %v559 = vmul.f32 %v536, %v113
    %v560 = vmul.f32 %v539, %v114
    %v561 = vmul.f32 %v542, %v115
    %v562 = vmul.f32 %v545, %v116
    %v563 = vmul.f32 %v548, %v117
    %v564 = vmul.f32 %v551, %v118
    %v565 = vmul.f32 %v554, %v119
    %v566 = vmul.f32 %v557, %v120
    %v568 = vsel %vm127, %v464, 0
    %v571 = vsel %vm127, %v467, 0
    %v574 = vsel %vm127, %v559, 0
    %v577 = vsel %vm127, %v560, 0
    %v580 = vsel %vm127, %v561, 0
    %v583 = vsel %vm127, %v562, 0
    %v586 = vsel %vm127, %v563, 0
    %v589 = vsel %vm127, %v564, 0
    %v592 = vsel %vm127, %v565, 0
    %v595 = vsel %vm127, %v566, 0
    %597 = vmatpush.xpose.msra.mxu0 0.0
    %598 = vmatpush.xpose.msra.mxu0 0.0
    %599 = vmatpush.xpose.msra.mxu0 0.0
    %600 = vmatpush.xpose.msra.mxu0 0.0
    %601 = vmatpush.xpose.msra.mxu0 0.0
    %602 = vmatpush.xpose.msra.mxu0 0.0
    %603 = vmatpush.xpose.msra.mxu0 0.0
    %604 = vmatpush.xpose.msra.mxu0 0.0
    %605 = vmatpush.xpose.msra.mxu0 %v595
    %606 = vmatpush.xpose.msra.mxu0 %v592
    %607 = vmatpush.xpose.msra.mxu0 %v589
    %608 = vmatpush.xpose.msra.mxu0 %v586
    %609 = vmatpush.xpose.msra.mxu0 %v583
    %610 = vmatpush.xpose.msra.mxu0 %v580
    %611 = vmatpush.xpose.msra.mxu0 %v577
    %612 = vmatpush.xpose.msra.mxu0 %v574
    %613 = vmatmul.f32.gmra.mxu0 %v568
    %v614 = vpop.f32.mrf.mxu0
    %v615 = vadd.f32 %v103, %v614
    %616 = vmatmul.f32.gmra.mxu0 %v571
    %v617 = vpop.f32.mrf.mxu0
    %v618 = vadd.f32 %v104, %v617
    %619 = vdwg.mxu0
    %v620 = vsel %vm290, %v615, -inf
    %621 = vmax.xlane.f32.xlu0 %v620
    %v622 = vpop.xlane.xlu0 %621
    %v623 = vsel %vm290, %v618, -inf
    %624 = vmax.xlane.f32.xlu0 %v623
    %v625 = vpop.xlane.xlu0 %624
    %v626 = vsub.f32 %v615, %v622
    %v627 = vsub.f32 %v618, %v625
    %v628 = vmul.f32 %v626, 1.442695
    %v629 = vpow.pop %v628
    %v630 = vmul.f32 %v627, 1.442695
    %v631 = vpow.pop %v630
    %632 = vrot.lane.b32.xlu0 %v559, 96
    %v633 = vpop.permute.xlu0 %632
    %634 = vrot.lane.b32.xlu0 %v560, 96
    %v635 = vpop.permute.xlu0 %634
    %636 = vrot.lane.b32.xlu0 %v561, 96
    %v637 = vpop.permute.xlu0 %636
    %638 = vrot.lane.b32.xlu0 %v562, 96
    %v639 = vpop.permute.xlu0 %638
    %640 = vrot.lane.b32.xlu0 %v563, 96
    %v641 = vpop.permute.xlu0 %640
    %642 = vrot.lane.b32.xlu0 %v564, 96
    %v643 = vpop.permute.xlu0 %642
    %644 = vrot.lane.b32.xlu0 %v565, 96
    %v645 = vpop.permute.xlu0 %644
    %646 = vrot.lane.b32.xlu0 %v566, 96
    %v647 = vpop.permute.xlu0 %646
    %v657 = vsel %vm290, %v629, 0
    %v660 = vsel %vm290, %v631, 0
    %662 = vmatpush.msra.mxu0 0.0
    %663 = vmatpush.msra.mxu0 0.0
    %664 = vmatpush.msra.mxu0 0.0
    %665 = vmatpush.msra.mxu0 0.0
    %666 = vmatpush.msra.mxu0 0.0
    %667 = vmatpush.msra.mxu0 0.0
    %668 = vmatpush.msra.mxu0 0.0
    %669 = vmatpush.msra.mxu0 0.0
    %670 = vmatpush.msra.mxu0 %v647
    %671 = vmatpush.msra.mxu0 %v645
    %672 = vmatpush.msra.mxu0 %v643
    %673 = vmatpush.msra.mxu0 %v641
    %674 = vmatpush.msra.mxu0 %v639
    %675 = vmatpush.msra.mxu0 %v637
    %676 = vmatpush.msra.mxu0 %v635
    %677 = vmatpush.msra.mxu0 %v633
    %678 = vmatmul.f32.gmra.mxu0 %v657
    %v679 = vpop.f32.mrf.mxu0
    %v680 = vadd.f32 0.0, %v679
    %681 = vmatmul.f32.gmra.mxu0 %v660
    %v682 = vpop.f32.mrf.mxu0
    %v683 = vadd.f32 0.0, %v682
    %684 = vdwg.mxu0
    %v685 = vmax.f32 %v680, 1e-30
    %v686 = vmax.f32 %v683, 1e-30
    %v687 = vrcp.pop %v685
    %v688 = vrcp.pop %v686
    %691 = vrot.lane.b32.xlu0 %v687, 96
    %v692 = vpop.permute.xlu0 %691
    %693 = vrot.lane.b32.xlu0 %v688, 96
    %v694 = vpop.permute.xlu0 %693
    %v697 = vmul.f32 %v680, %v692
    %v698 = vmul.f32 %v683, %v694
    %v699 = vadd.f32 %v433, %v697
    %v700 = vadd.f32 %v434, %v698
    %v701 = vsel %vm127, %v699, 0.0
    %702 = vadd.xlane.f32.xlu0 %v701
    %v703 = vpop.xlane.xlu0 %702
    %v704 = vsel %vm127, %v700, 0.0
    %705 = vadd.xlane.f32.xlu0 %v704
    %v706 = vpop.xlane.xlu0 %705
    %v707 = vmul.f32 %v699, %v699
    %v708 = vmul.f32 %v700, %v700
    %v709 = vsel %vm127, %v707, 0.0
    %710 = vadd.xlane.f32.xlu0 %v709
    %v711 = vpop.xlane.xlu0 %710
    %v712 = vsel %vm127, %v708, 0.0
    %713 = vadd.xlane.f32.xlu0 %v712
    %v714 = vpop.xlane.xlu0 %713
    %v715 = vmul.f32 %v703, 0.03125
    %v716 = vmul.f32 %v706, 0.03125
    %v717 = vmul.f32 %v703, %v715
    %v718 = vmul.f32 %v706, %v716
    %v719 = vsub.f32 %v711, %v717
    %v720 = vsub.f32 %v714, %v718
    %v721 = vmul.f32 %v719, 0.032258064
    %v722 = vmul.f32 %v720, 0.032258064
    %v723 = vrsqrt.pop %v721
    %v724 = vmul.f32 %v723, %v721
    %v725 = vmul.f32 %v724, %v723
    %v726 = vmul.f32 0.5, %v725
    %v727 = vsub.f32 1.5, %v726
    %v728 = vmul.f32 %v723, %v727
    %v729 = vmul.f32 %v721, %v728
    %vm730 = vcmp.eq.f32.partialorder %v721, inf
    %v731 = vsel %vm730, %v721, %v729
    %vm732 = vcmp.eq.f32.partialorder %v721, 0.0
    %v733 = vand.u32 %v721, 2147483648
    %v734 = vsel %vm732, %v733, %v731
    %v735 = vrsqrt.pop %v722
    %v736 = vmul.f32 %v735, %v722
    %v737 = vmul.f32 %v736, %v735
    %v738 = vmul.f32 0.5, %v737
    %v739 = vsub.f32 1.5, %v738
    %v740 = vmul.f32 %v735, %v739
    %v741 = vmul.f32 %v722, %v740
    %vm742 = vcmp.eq.f32.partialorder %v722, inf
    %v743 = vsel %vm742, %v722, %v741
    %vm744 = vcmp.eq.f32.partialorder %v722, 0.0
    %v745 = vand.u32 %v722, 2147483648
    %v746 = vsel %vm744, %v745, %v743
    %v747 = vadd.f32 %v734, 1e-06
    %v748 = vadd.f32 %v746, 1e-06
    %v749 = vrcp.pop %v747
    %v750 = vrcp.pop %v748
    %v751 = vsub.f32 %v699, %v715
    %v752 = vsub.f32 %v700, %v716
    %v753 = vmul.f32 %v751, %v749
    %v754 = vmul.f32 %v752, %v750
    %757 = vrot.lane.b32.xlu0 %v753, 64
    %v758 = vpop.permute.xlu0 %757
    %759 = vrot.lane.b32.xlu0 %v754, 64
    %v760 = vpop.permute.xlu0 %759
    %v763 = vmul.f32 %v426, %v758
    %v764 = vmul.f32 %v426, %v760
    %v765 = vadd.f32 %v763, %v431
    %v766 = vadd.f32 %v764, %v431
    %v767 = vld [vmem:[#allocation7] sm:$0xff]
    %v768 = vld [vmem:[#allocation7 + $0x8] sm:$0xff]
    %v769 = vld [vmem:[#allocation7 + $0x10] sm:$0xff]
    %v770 = vld [vmem:[#allocation7 + $0x18] sm:$0xff]
    %v771 = vperm.slane %v121, 2
    %774 = vrot.lane.b32.xlu0 %v765, 64
    %v775 = vpop.permute.xlu0 %774
    %776 = vrot.lane.b32.xlu0 %v766, 64
    %v777 = vpop.permute.xlu0 %776
    %v778 = vsel %vm127, %v775, 0
    %v780 = vsel %vm127, %v777, 0
    %782 = vmatpush.msra.mxu0 0.0
    %783 = vmatpush.msra.mxu0 0.0
    %784 = vmatpush.msra.mxu0 0.0
    %785 = vmatpush.msra.mxu0 0.0
    %786 = vmatpush.msra.mxu0 0.0
    %787 = vmatpush.msra.mxu0 0.0
    %788 = vmatpush.msra.mxu0 0.0
    %789 = vmatpush.msra.mxu0 0.0
    %790 = vmatpush.msra.mxu0 0.0
    %791 = vmatpush.msra.mxu0 0.0
    %792 = vmatpush.msra.mxu0 0.0
    %793 = vmatpush.msra.mxu0 0.0
    %794 = vmatpush.msra.mxu0 %v770
    %795 = vmatpush.msra.mxu0 %v769
    %796 = vmatpush.msra.mxu0 %v768
    %797 = vmatpush.msra.mxu0 %v767
    %798 = vmatmul.f32.gmra.mxu0 %v778
    %v799 = vpop.f32.mrf.mxu0
    %v800 = vadd.f32 %v771, %v799
    %801 = vmatmul.f32.gmra.mxu0 %v780
    %v802 = vpop.f32.mrf.mxu0
    %v803 = vadd.f32 %v771, %v802
    %804 = vdwg.mxu0
    %v805 = vmax.f32 %v800, 0.0
    %v806 = vmax.f32 %v803, 0.0
    %v807 = vld [vmem:[%s8] sm:$0xff]
    %v808 = vld [vmem:[%s8 + $0x8] sm:$0xff]
    %v809 = vld [vmem:[%s8 + $0x10] sm:$0xff]
    %v810 = vld [vmem:[%s8 + $0x18] sm:$0xff]
    %v811 = vld [vmem:[%s8 + $0x20] sm:$0xff]
    %v812 = vld [vmem:[%s8 + $0x28] sm:$0xff]
    %v813 = vld [vmem:[%s8 + $0x30] sm:$0xff]
    %v814 = vld [vmem:[%s8 + $0x38] sm:$0xff]
    %816 = vrot.lane.b32.xlu0 %v771, 64
    %v817 = vpop.permute.xlu0 %816
    %v820 = vsel %vm290, %v805, 0
    %v823 = vsel %vm290, %v806, 0
    %825 = vmatpush.msra.mxu0 0.0
    %826 = vmatpush.msra.mxu0 0.0
    %827 = vmatpush.msra.mxu0 0.0
    %828 = vmatpush.msra.mxu0 0.0
    %829 = vmatpush.msra.mxu0 0.0
    %830 = vmatpush.msra.mxu0 0.0
    %831 = vmatpush.msra.mxu0 0.0
    %832 = vmatpush.msra.mxu0 0.0
    %833 = vmatpush.msra.mxu0 %v814
    %834 = vmatpush.msra.mxu0 %v813
    %835 = vmatpush.msra.mxu0 %v812
    %836 = vmatpush.msra.mxu0 %v811
    %837 = vmatpush.msra.mxu0 %v810
    %838 = vmatpush.msra.mxu0 %v809
    %839 = vmatpush.msra.mxu0 %v808
    %840 = vmatpush.msra.mxu0 %v807
    %841 = vmatmul.f32.gmra.mxu0 %v820
    %v842 = vpop.f32.mrf.mxu0
    %v843 = vadd.f32 %v817, %v842
    %844 = vmatmul.f32.gmra.mxu0 %v823
    %v845 = vpop.f32.mrf.mxu0
    %v846 = vadd.f32 %v817, %v845
    %847 = vdwg.mxu0
    %850 = vrot.lane.b32.xlu0 %v843, 64
    %v851 = vpop.permute.xlu0 %850
    %852 = vrot.lane.b32.xlu0 %v846, 64
    %v853 = vpop.permute.xlu0 %852
    %v856 = vadd.f32 %v765, %v851
    %v857 = vadd.f32 %v766, %v853
    %860 = vrot.lane.b32.xlu0 %v856, 64
    %v861 = vpop.permute.xlu0 %860
    %862 = vrot.lane.b32.xlu0 %v857, 64
    %v863 = vpop.permute.xlu0 %862
    %v866 = vsel %vm127, %v861, 0.0
    %867 = vadd.xlane.f32.xlu0 %v866
    %v868 = vpop.xlane.xlu0 %867
    %v869 = vsel %vm127, %v863, 0.0
    %870 = vadd.xlane.f32.xlu0 %v869
    %v871 = vpop.xlane.xlu0 %870
    %v872 = vmul.f32 %v856, %v856
    %v873 = vmul.f32 %v857, %v857
    %876 = vrot.lane.b32.xlu0 %v872, 64
    %v877 = vpop.permute.xlu0 %876
    %878 = vrot.lane.b32.xlu0 %v873, 64
    %v879 = vpop.permute.xlu0 %878
    %v882 = vsel %vm127, %v877, 0.0
    %883 = vadd.xlane.f32.xlu0 %v882
    %v884 = vpop.xlane.xlu0 %883
    %v885 = vsel %vm127, %v879, 0.0
    %886 = vadd.xlane.f32.xlu0 %v885
    %v887 = vpop.xlane.xlu0 %886
    %v888 = vmul.f32 %v868, 0.03125
    %v889 = vmul.f32 %v871, 0.03125
    %v890 = vmul.f32 %v868, %v888
    %v891 = vmul.f32 %v871, %v889
    %v892 = vsub.f32 %v884, %v890
    %v893 = vsub.f32 %v887, %v891
    %v894 = vmul.f32 %v892, 0.032258064
    %v895 = vmul.f32 %v893, 0.032258064
    %v896 = vrsqrt.pop %v894
    %v897 = vmul.f32 %v896, %v894
    %v898 = vmul.f32 %v897, %v896
    %v899 = vmul.f32 0.5, %v898
    %v900 = vsub.f32 1.5, %v899
    %v901 = vmul.f32 %v896, %v900
    %v902 = vmul.f32 %v894, %v901
    %vm903 = vcmp.eq.f32.partialorder %v894, inf
    %v904 = vsel %vm903, %v894, %v902
    %vm905 = vcmp.eq.f32.partialorder %v894, 0.0
    %v906 = vand.u32 %v894, 2147483648
    %v907 = vsel %vm905, %v906, %v904
    %v908 = vrsqrt.pop %v895
    %v909 = vmul.f32 %v908, %v895
    %v910 = vmul.f32 %v909, %v908
    %v911 = vmul.f32 0.5, %v910
    %v912 = vsub.f32 1.5, %v911
    %v913 = vmul.f32 %v908, %v912
    %v914 = vmul.f32 %v895, %v913
    %vm915 = vcmp.eq.f32.partialorder %v895, inf
    %v916 = vsel %vm915, %v895, %v914
    %vm917 = vcmp.eq.f32.partialorder %v895, 0.0
    %v918 = vand.u32 %v895, 2147483648
    %v919 = vsel %vm917, %v918, %v916
    %v920 = vadd.f32 %v907, 1e-06
    %v921 = vadd.f32 %v919, 1e-06
    %v922 = vrcp.pop %v920
    %v923 = vrcp.pop %v921
    %v924 = vsub.f32 %v856, %v888
    %v925 = vsub.f32 %v857, %v889
    %v926 = vmul.f32 %v924, %v922
    %v927 = vmul.f32 %v925, %v923
    %v928 = vperm.slane %v121, 4
    %931 = vrot.lane.b32.xlu0 %v926, 64
    %v932 = vpop.permute.xlu0 %931
    %933 = vrot.lane.b32.xlu0 %v927, 64
    %v934 = vpop.permute.xlu0 %933
    %v937 = vmul.f32 %v928, %v932
    %v938 = vmul.f32 %v928, %v934
    %940 = vrot.lane.b32.xlu0 %v928, 96
    %v941 = vpop.permute.xlu0 %940
    %v943 = vadd.f32 %v937, %v941
    %v944 = vadd.f32 %v938, %v941
    %945 = vst.msk [vmem:[#allocation10] sm:$0xff] %vm127, %v943
    %946 = vst.msk [vmem:[#allocation10 + $0x8] sm:$0xff] %vm127, %v944
    // Predicated region
    $region58: #{decoder_layer.1} parent=1 // pred_check
      _
    $region59: #{decoder_layer.1} parent=1 // pred_check_branch
      %948 = sbr.rel (0) target = $region61
    $region60: #{decoder_layer.1} parent=1 // pred_region
      %950 = vsyncadd [#allocation4], 0
      %s951 = sshll.u32 [#allocation10], 4
      %s952 = int_to_ptr.vmem [resolvable:$true] %s951
      %s953 = sshll.u32 %s10, 4
      %s954 = int_to_ptr.hbm [resolvable:$true] %s953
      %959 = dma.vmem_to_hbm [thread:$0]  %s952, 256, %s954, [#allocation4], 128, 128, 8
    $region61: #{decoder_layer.1} parent=1 // pred_fallthru
      _
    // Predicated region
    $region62: #{decoder_layer.1} parent=1 // pred_check
      _
    $region63: #{decoder_layer.1} parent=1 // pred_check_branch
      %961 = sbr.rel (0) target = $region65
    $region64: #{decoder_layer.1} parent=1 // pred_region
      %963 = dma.done [#allocation4], 256
    $region65: #{decoder_layer.1} parent=1 // pred_fallthru
      _
    %964 = vsyncpa [#allocation3], 1
    %965 = vsyncpa [#allocation6], 1
    %966 = vsyncpa [#allocation9], 1
    %967 = vsyncpa [#allocation4], 1

</llo_original>
